<compile_context>
chip_gen: v5e
topology: v5e:2x2
jax: 0.10.0
libtpu: 0.0.40
codegen_flags: <defaults>
</compile_context>

<pallas_src>
import jax
import jax.numpy as jnp
from jax.experimental import pallas as pl
from jax.experimental.pallas import tpu as pltpu


def duc_matmul_kernel(w_ref, scale_ref, shift_ref, p_ref, o_ref):
    """One (batch, spatial-tile) grid step.

    w_ref:     (Cout, K)     conv weights as a 2-D (K = 9*Cin) matrix, VMEM-resident
    scale_ref: (Cout, 1)     fused BN scale  = gamma / sqrt(var + eps)         (f32)
    shift_ref: (Cout, 1)     fused BN shift  = (conv_bias - mean) * scale + beta (f32)
    p_ref:     (1, K, TS)    im2col patches for this spatial tile
    o_ref:     (1, Cout, TS) conv+bn+relu output (spatial on lanes -> lane-dense store)
    """
    acc = jnp.dot(w_ref[...], p_ref[0],
                  preferred_element_type=jnp.float32)          # (Cout, TS), f32 accum
    y = acc * scale_ref[...] + shift_ref[...]                  # fused bias + batchnorm
    o_ref[0] = jnp.maximum(y, 0.0).astype(o_ref.dtype)         # ReLU


def _pick_spatial_tile(S, cap=1024):
    """Largest multiple-of-128 divisor of S that is <= cap; else the full extent."""
    if S % 128 != 0:
        return S
    start = min(S, cap)
    for ts in range(start, 0, -128):
        if S % ts == 0:
            return ts
    return S


def duc_forward(x_nchw, conv_w, conv_b, bn_gamma, bn_beta, bn_mean, bn_var,
                num_classes, down_factor, eps=1e-5,
                compute_dtype=jnp.bfloat16, spatial_tile=None):
    """Full DenseUpsamplingConvModule forward. Input/output in NCHW like PyTorch."""
    N, Cin, H, W = x_nchw.shape
    r = down_factor
    Cout = num_classes * r * r
    assert conv_w.shape == (Cout, Cin, 3, 3)
    K = 9 * Cin
    S = H * W

    # --- wrapper-side im2col (tap-major channel order: k = (ky*3+kx)*Cin + c) ---
    x_pad = jnp.pad(x_nchw, ((0, 0), (0, 0), (1, 1), (1, 1)))
    taps = [x_pad[:, :, ky:ky + H, kx:kx + W]
            for ky in range(3) for kx in range(3)]
    patches = jnp.concatenate(taps, axis=1)                    # (N, 9*Cin, H, W)
    patches = patches.reshape(N, K, S).astype(compute_dtype)   # (N, K, H*W)

    # --- weights: OIHW -> (O, ky, kx, I) -> (Cout, 9*Cin), matching the tap order ---
    w2d = jnp.transpose(conv_w, (0, 2, 3, 1)).reshape(Cout, K).astype(compute_dtype)

    # --- fuse conv bias + BN (inference) into per-channel scale/shift (f32) ---
    scale = (bn_gamma / jnp.sqrt(bn_var + eps)).astype(jnp.float32)
    shift = ((conv_b - bn_mean) * scale + bn_beta).astype(jnp.float32)
    scale = scale.reshape(Cout, 1)
    shift = shift.reshape(Cout, 1)

    ts = spatial_tile if spatial_tile is not None else _pick_spatial_tile(S)
    assert S % ts == 0
    n_s = S // ts

    out = pl.pallas_call(
        duc_matmul_kernel,
        out_shape=jax.ShapeDtypeStruct((N, Cout, S), jnp.float32),
        grid_spec=pltpu.PrefetchScalarGridSpec(
            num_scalar_prefetch=0,
            grid=(N, n_s),
            in_specs=[
                pl.BlockSpec((Cout, K), lambda n, j: (0, 0)),   # weights: resident
                pl.BlockSpec((Cout, 1), lambda n, j: (0, 0)),   # scale:   resident
                pl.BlockSpec((Cout, 1), lambda n, j: (0, 0)),   # shift:   resident
                pl.BlockSpec((1, K, ts), lambda n, j: (n, 0, j)),
            ],
            out_specs=pl.BlockSpec((1, Cout, ts), lambda n, j: (n, 0, j)),
        ),
        compiler_params=pltpu.CompilerParams(
            dimension_semantics=("parallel", "parallel"),
            vmem_limit_bytes=48 * 1024 * 1024),
    )(w2d, scale, shift, patches)

    # Output is already channels-first: (N, Cout, H*W) -> (N, Cout, H, W).
    y = out.reshape(N, Cout, H, W)
    # PixelShuffle: (N, C*r*r, H, W) -> (N, C, H*r, W*r).
    y = y.reshape(N, num_classes, r, r, H, W)
    y = jnp.transpose(y, (0, 1, 4, 2, 5, 3))
    return y.reshape(N, num_classes, H * r, W * r)


def duc_reference(x_nchw, conv_w, conv_b, bn_gamma, bn_beta, bn_mean, bn_var,
                  num_classes, down_factor, eps=1e-5):
    """Pure-JAX reference (matches PyTorch eval-mode semantics)."""
    N, Cin, H, W = x_nchw.shape
    r = down_factor
    y = jax.lax.conv_general_dilated(
        x_nchw.astype(jnp.float32), conv_w.astype(jnp.float32),
        window_strides=(1, 1), padding=((1, 1), (1, 1)),
        dimension_numbers=("NCHW", "OIHW", "NCHW"))
    y = y + conv_b[None, :, None, None]
    y = (y - bn_mean[None, :, None, None]) / jnp.sqrt(bn_var[None, :, None, None] + eps)
    y = y * bn_gamma[None, :, None, None] + bn_beta[None, :, None, None]
    y = jnp.maximum(y, 0.0)
    y = y.reshape(N, num_classes, r, r, H, W)
    y = jnp.transpose(y, (0, 1, 4, 2, 5, 3))
    return y.reshape(N, num_classes, H * r, W * r)


if __name__ == "__main__":
    num_classes = 3
    down_factor = 2
    in_dim = 4
    N, H, W = 2, 16, 16
    Cout = down_factor ** 2 * num_classes  # 12

    key = jax.random.PRNGKey(0)
    k = jax.random.split(key, 7)
    x = jax.random.normal(k[0], (N, in_dim, H, W), jnp.float32)
    conv_w = jax.random.normal(k[1], (Cout, in_dim, 3, 3), jnp.float32) * 0.1
    conv_b = jax.random.normal(k[2], (Cout,), jnp.float32) * 0.1
    bn_gamma = 1.0 + 0.1 * jax.random.normal(k[3], (Cout,), jnp.float32)
    bn_beta = 0.1 * jax.random.normal(k[4], (Cout,), jnp.float32)
    bn_mean = 0.1 * jax.random.normal(k[5], (Cout,), jnp.float32)
    bn_var = jnp.abs(jax.random.normal(k[6], (Cout,), jnp.float32)) + 0.5

    ref = duc_reference(x, conv_w, conv_b, bn_gamma, bn_beta, bn_mean, bn_var,
                        num_classes, down_factor)

    # Default path: bf16 MXU operands, f32 accumulation + f32 BN/ReLU epilogue.
    out = duc_forward(x, conv_w, conv_b, bn_gamma, bn_beta, bn_mean, bn_var,
                      num_classes, down_factor, compute_dtype=jnp.bfloat16)
    out = jax.block_until_ready(out)
    assert out.shape == (N, num_classes, H * down_factor, W * down_factor)
    # bf16 operand rounding vs f32 reference -> loosened tolerance.
    assert jnp.allclose(out, ref, atol=5e-2, rtol=5e-2)

    # Exact-semantics check: with f32 operands the kernel matches the f32 reference tightly.
    out_f32 = duc_forward(x, conv_w, conv_b, bn_gamma, bn_beta, bn_mean, bn_var,
                          num_classes, down_factor, compute_dtype=jnp.float32)
    out_f32 = jax.block_until_ready(out_f32)
    assert jnp.allclose(out_f32, ref, atol=1e-3, rtol=1e-3)

    print("KERNEL_OK")
</pallas_src>

<mosaic_0001>
module attributes {stable_mosaic.version = 11 : i64} {
  func.func @duc_matmul_kernel(%arg0: i32, %arg1: i32, %arg2: memref<12x36xbf16, #tpu.memory_space<vmem>>, %arg3: memref<12x1xf32, #tpu.memory_space<vmem>>, %arg4: memref<12x1xf32, #tpu.memory_space<vmem>>, %arg5: memref<1x36x256xbf16, #tpu.memory_space<vmem>>, %arg6: memref<1x12x256xf32, #tpu.memory_space<vmem>>) attributes {dimension_semantics = [#tpu.dimension_semantics<parallel>, #tpu.dimension_semantics<parallel>], iteration_bounds = array<i64: 2, 1>, scalar_prefetch = 0 : i64, scratch_operands = 0 : i64, tpu.core_type = #tpu.core_type<tc>, window_params = [{pipeline_mode = #tpu.pipeline_mode<synchronous>, transform_indices = @transform_0, window_bounds = array<i64: 12, 36>}, {pipeline_mode = #tpu.pipeline_mode<synchronous>, transform_indices = @transform_1, window_bounds = array<i64: 12, 1>}, {pipeline_mode = #tpu.pipeline_mode<synchronous>, transform_indices = @transform_2, window_bounds = array<i64: 12, 1>}, {transform_indices = @transform_3, window_bounds = array<i64: 1, 36, 256>}, {transform_indices = @transform_4, window_bounds = array<i64: 1, 12, 256>}]} {
    %c0 = arith.constant 0 : index
    %c0_0 = arith.constant 0 : index
    %0 = vector.load %arg2[%c0, %c0_0] : memref<12x36xbf16, #tpu.memory_space<vmem>>, vector<12x36xbf16>
    %c0_1 = arith.constant 0 : index
    %c0_2 = arith.constant 0 : index
    %c0_3 = arith.constant 0 : index
    %1 = vector.load %arg5[%c0_1, %c0_2, %c0_3] : memref<1x36x256xbf16, #tpu.memory_space<vmem>>, vector<1x36x256xbf16>
    %2 = vector.shape_cast %1 : vector<1x36x256xbf16> to vector<36x256xbf16>
    %cst = arith.constant dense<0.000000e+00> : vector<12x256xf32>
    %3 = tpu.matmul %0, %2, %cst {dimension_numbers = #tpu.dot_dimension_numbers<[1], [0], [0], [1], [0, 0, 1, 1], [], []>} : vector<12x36xbf16>, vector<36x256xbf16>, vector<12x256xf32> -> vector<12x256xf32>
    %c0_4 = arith.constant 0 : index
    %c0_5 = arith.constant 0 : index
    %4 = vector.load %arg3[%c0_4, %c0_5] : memref<12x1xf32, #tpu.memory_space<vmem>>, vector<12x1xf32>
    %5 = vector.broadcast %4 : vector<12x1xf32> to vector<12x256xf32>
    %6 = arith.mulf %3, %5 : vector<12x256xf32>
    %c0_6 = arith.constant 0 : index
    %c0_7 = arith.constant 0 : index
    %7 = vector.load %arg4[%c0_6, %c0_7] : memref<12x1xf32, #tpu.memory_space<vmem>>, vector<12x1xf32>
    %8 = vector.broadcast %7 : vector<12x1xf32> to vector<12x256xf32>
    %9 = arith.addf %6, %8 : vector<12x256xf32>
    %cst_8 = arith.constant 0.000000e+00 : f32
    %10 = vector.broadcast %cst_8 : f32 to vector<12x256xf32>
    %11 = arith.maximumf %9, %10 : vector<12x256xf32>
    %c0_9 = arith.constant 0 : index
    %c0_10 = arith.constant 0 : index
    %c0_11 = arith.constant 0 : index
    %12 = vector.load %arg6[%c0_9, %c0_10, %c0_11] : memref<1x12x256xf32, #tpu.memory_space<vmem>>, vector<1x12x256xf32>
    %13 = vector.shape_cast %12 : vector<1x12x256xf32> to vector<12x256xf32>
    %14 = vector.shape_cast %11 : vector<12x256xf32> to vector<1x12x256xf32>
    tpu.vector_store %arg6[%c0_9, %c0_10, %c0_11], %14 {strides = array<i32>} : memref<1x12x256xf32, #tpu.memory_space<vmem>>, vector<1x12x256xf32>,
    return
  }
  func.func @transform_0(%arg0: i32, %arg1: i32) -> (i32, i32) {
    %c0_i32 = arith.constant 0 : i32
    %c0_i32_0 = arith.constant 0 : i32
    %c0_i32_1 = arith.constant 0 : i32
    return %c0_i32, %c0_i32_0 : i32, i32
  }
  func.func @transform_1(%arg0: i32, %arg1: i32) -> (i32, i32) {
    %c0_i32 = arith.constant 0 : i32
    %c0_i32_0 = arith.constant 0 : i32
    %c0_i32_1 = arith.constant 0 : i32
    return %c0_i32, %c0_i32_0 : i32, i32
  }
  func.func @transform_2(%arg0: i32, %arg1: i32) -> (i32, i32) {
    %c0_i32 = arith.constant 0 : i32
    %c0_i32_0 = arith.constant 0 : i32
    %c0_i32_1 = arith.constant 0 : i32
    return %c0_i32, %c0_i32_0 : i32, i32
  }
  func.func @transform_3(%arg0: i32, %arg1: i32) -> (i32, i32, i32) {
    %c0_i32 = arith.constant 0 : i32
    %c0_i32_0 = arith.constant 0 : i32
    return %arg0, %c0_i32, %arg1 : i32, i32, i32
  }
  func.func @transform_4(%arg0: i32, %arg1: i32) -> (i32, i32, i32) {
    %c0_i32 = arith.constant 0 : i32
    %c0_i32_0 = arith.constant 0 : i32
    return %arg0, %c0_i32, %arg1 : i32, i32, i32
  }
}

</mosaic_0001>

<llo_original>
// kernel: tpu_custom_call.1
$region0: #{tpu_custom_call.1}
  #allocation0 [shape = 'u32[]', space=smem, size = 0x4, offset = 0x4, fixed_abs, tag = 'smem constant byte address 0x4 - core index']
  #allocation1 [shape = 'u32[72,128]{1,0:T(1,128)}', space=vmem, size = 0x9000, scoped, tag = 'internal scratch']
  %s0 = inlined_call_operand.vmem [shape: bf16[12,36], index: 0, kind: input, shape index: {}]
  %s1 = inlined_call_operand.vmem [shape: f32[12,1], index: 1, kind: input, shape index: {}]
  %s2 = inlined_call_operand.vmem [shape: f32[12,1], index: 2, kind: input, shape index: {}]
  %s3 = inlined_call_operand.vmem [shape: bf16[2,36,256], index: 3, kind: input, shape index: {}]
  %s4 = inlined_call_operand.vmem [shape: f32[2,12,256], index: 4, kind: output, shape index: {}]
  %s5 = sld [smem:[#allocation0]]
  $region49: #{tpu_custom_call.1} parent=0
    _
  %s7 = ssub.s32 1, %s5
  %s8 = scalar_select 0, %s7, %s5
  loop: start=0, step=1, limit=4
  $region2: #{tpu_custom_call.1} parent=0 // loop_pre_header
    _
  $region3: #{tpu_custom_call.1} parent=0 // loop_header
    %s10 = sphi 0, %s14
    %p11 = scmp.ge.s32.totalorder %s10, 4
    %s17 = sphi 0, %s29
    %s18 = sphi 0, %s25
    %s19 = sphi 0, %s17
    %s20 = sphi 0, %s18
    %s21 = sphi 0, %s19
    %s22 = sphi 0, %s20
    %s30 = sphi 0, %s30
    %s32 = sphi 0, %s30
    %s33 = sphi 0, %s32
    %s47 = sphi 0, %s33
    %s51 = sphi 0, %s51
    %s53 = sphi 0, %s51
    %s54 = sphi 0, %s53
    %s68 = sphi 0, %s54
    %s72 = sphi 0, %s72
    %s74 = sphi 0, %s72
    %s75 = sphi 0, %s74
    %s89 = sphi 0, %s75
    %s97 = sphi 0, %s99
    %s100 = sphi 0, %s97
    %s101 = sphi 0, %s100
    %s117 = sphi 0, %s101
    %s125 = sphi 0, %s127
    %s128 = sphi 0, %s125
    %s129 = sphi 0, %s128
    %s145 = sphi 0, %s129
  $region4: #{tpu_custom_call.1} parent=0 // loop_header_branch
    %13 = sbr.rel (%p11) target = $region8
  $region5: #{tpu_custom_call.1} parent=0 // loop_body
    %s15 = ssub.s32 %s10, 1
    %s16 = ssub.s32 %s10, 2
    %s23 = sadd.s32 1, %s18
    %p24 = scmp.ge.s32.totalorder %s23, 1
    %s25 = scalar_select %p24, 0, %s23
    %s26 = sadd.s32 1, %s17
    %s27 = scalar_select %p24, %s26, %s17
    %p28 = scmp.ge.s32.totalorder %s27, 2
    %s29 = scalar_select %p28, 0, %s27
    %s31 = sadd.s32 %s30, 1
    %p34 = scmp.eq.s32.totalorder %s10, 1
    %p35 = scmp.ne.s32.totalorder %s30, %s32
    %p36 = scmp.eq.s32.totalorder %s10, 0
    %p37 = por %p35, %p36
    %p38 = scmp.ne.s32.totalorder %s30, %s32
    %p39 = scmp.eq.s32.totalorder %s15, 1
    %p40 = por %p38, %p39
    %p41 = scmp.ne.s32.totalorder %s32, %s33
    %p42 = scmp.eq.s32.totalorder %s15, 0
    %p43 = por %p41, %p42
    %p44 = scmp.ne.s32.totalorder %s32, %s33
    %p45 = scmp.eq.s32.totalorder %s16, 1
    %p46 = por %p44, %p45
    %p48 = scmp.ne.s32.totalorder %s33, %s47
    %p49 = scmp.eq.s32.totalorder %s16, 0
    %p50 = por %p48, %p49
    %s52 = sadd.s32 %s51, 1
    %p55 = scmp.eq.s32.totalorder %s10, 1
    %p56 = scmp.ne.s32.totalorder %s51, %s53
    %p57 = scmp.eq.s32.totalorder %s10, 0
    %p58 = por %p56, %p57
    %p59 = scmp.ne.s32.totalorder %s51, %s53
    %p60 = scmp.eq.s32.totalorder %s15, 1
    %p61 = por %p59, %p60
    %p62 = scmp.ne.s32.totalorder %s53, %s54
    %p63 = scmp.eq.s32.totalorder %s15, 0
    %p64 = por %p62, %p63
    %p65 = scmp.ne.s32.totalorder %s53, %s54
    %p66 = scmp.eq.s32.totalorder %s16, 1
    %p67 = por %p65, %p66
    %p69 = scmp.ne.s32.totalorder %s54, %s68
    %p70 = scmp.eq.s32.totalorder %s16, 0
    %p71 = por %p69, %p70
    %s73 = sadd.s32 %s72, 1
    %p76 = scmp.eq.s32.totalorder %s10, 1
    %p77 = scmp.ne.s32.totalorder %s72, %s74
    %p78 = scmp.eq.s32.totalorder %s10, 0
    %p79 = por %p77, %p78
    %p80 = scmp.ne.s32.totalorder %s72, %s74
    %p81 = scmp.eq.s32.totalorder %s15, 1
    %p82 = por %p80, %p81
    %p83 = scmp.ne.s32.totalorder %s74, %s75
    %p84 = scmp.eq.s32.totalorder %s15, 0
    %p85 = por %p83, %p84
    %p86 = scmp.ne.s32.totalorder %s74, %s75
    %p87 = scmp.eq.s32.totalorder %s16, 1
    %p88 = por %p86, %p87
    %p90 = scmp.ne.s32.totalorder %s75, %s89
    %p91 = scmp.eq.s32.totalorder %s16, 0
    %p92 = por %p90, %p91
    %s93 = ssub.s32 %s17, %s29
    %s94 = ssub.s32 %s18, %s25
    %s95 = sor.u32 %s93, %s94
    %p96 = scmp.eq.s32.totalorder %s95, 0
    %s98 = sadd.s32 %s97, 1
    %s99 = scalar_select %p96, %s97, %s98
    %p102 = pneg %p96
    %p103 = scmp.eq.s32.totalorder %s10, 1
    %p104 = por %p102, %p103
    %p105 = scmp.ne.s32.totalorder %s97, %s100
    %p106 = scmp.eq.s32.totalorder %s10, 0
    %p107 = por %p105, %p106
    %p108 = scmp.ne.s32.totalorder %s97, %s100
    %p109 = scmp.eq.s32.totalorder %s15, 1
    %p110 = por %p108, %p109
    %p111 = scmp.ne.s32.totalorder %s100, %s101
    %p112 = scmp.eq.s32.totalorder %s15, 0
    %p113 = por %p111, %p112
    %p114 = scmp.ne.s32.totalorder %s100, %s101
    %p115 = scmp.eq.s32.totalorder %s16, 1
    %p116 = por %p114, %p115
    %p118 = scmp.ne.s32.totalorder %s101, %s117
    %p119 = scmp.eq.s32.totalorder %s16, 0
    %p120 = por %p118, %p119
    %s121 = ssub.s32 %s17, %s29
    %s122 = ssub.s32 %s18, %s25
    %s123 = sor.u32 %s121, %s122
    %p124 = scmp.eq.s32.totalorder %s123, 0
    %s126 = sadd.s32 %s125, 1
    %s127 = scalar_select %p124, %s125, %s126
    %p130 = pneg %p124
    %p131 = scmp.eq.s32.totalorder %s10, 1
    %p132 = por %p130, %p131
    %p133 = scmp.ne.s32.totalorder %s125, %s128
    %p134 = scmp.eq.s32.totalorder %s10, 0
    %p135 = por %p133, %p134
    %p136 = scmp.ne.s32.totalorder %s125, %s128
    %p137 = scmp.eq.s32.totalorder %s15, 1
    %p138 = por %p136, %p137
    %p139 = scmp.ne.s32.totalorder %s128, %s129
    %p140 = scmp.eq.s32.totalorder %s15, 0
    %p141 = por %p139, %p140
    %p142 = scmp.ne.s32.totalorder %s128, %s129
    %p143 = scmp.eq.s32.totalorder %s16, 1
    %p144 = por %p142, %p143
    %p146 = scmp.ne.s32.totalorder %s129, %s145
    %p147 = scmp.eq.s32.totalorder %s16, 0
    %p148 = por %p146, %p147
    %p149 = scmp.le.s32.totalorder 1, %s10
    %p150 = scmp.lt.s32.totalorder %s10, 3
    %p151 = pnand %p149, %p150
    %p152 = pneg %p151
    // Predicated region
    $region9: #{tpu_custom_call.1} parent=5 // pred_check
      _
    $region10: #{tpu_custom_call.1} parent=5 // pred_check_branch
      %154 = sbr.rel (%p151) target = $region12
    $region11: #{tpu_custom_call.1} parent=5 // pred_region
      %s155 = ssub.s32 %s10, 1
      // Predicated region
      $region13: #{tpu_custom_call.1} parent=11 // pred_check
        %p156 = pneg %p43
      $region14: #{tpu_custom_call.1} parent=11 // pred_check_branch
        %158 = sbr.rel (%p156) target = $region16
      $region15: #{tpu_custom_call.1} parent=11 // pred_region
        _
      $region16: #{tpu_custom_call.1} parent=11 // pred_fallthru
        _
      // Predicated region
      $region17: #{tpu_custom_call.1} parent=11 // pred_check
        %p159 = pneg %p64
      $region18: #{tpu_custom_call.1} parent=11 // pred_check_branch
        %161 = sbr.rel (%p159) target = $region20
      $region19: #{tpu_custom_call.1} parent=11 // pred_region
        _
      $region20: #{tpu_custom_call.1} parent=11 // pred_fallthru
        _
      // Predicated region
      $region21: #{tpu_custom_call.1} parent=11 // pred_check
        %p162 = pneg %p85
      $region22: #{tpu_custom_call.1} parent=11 // pred_check_branch
        %164 = sbr.rel (%p162) target = $region24
      $region23: #{tpu_custom_call.1} parent=11 // pred_region
        _
      $region24: #{tpu_custom_call.1} parent=11 // pred_fallthru
        _
    $region12: #{tpu_custom_call.1} parent=5 // pred_fallthru
      _
    %p165 = scmp.lt.s32.totalorder %s10, 2
    // Predicated region
    $region25: #{tpu_custom_call.1} parent=5 // pred_check
      %p166 = pneg %p165
    $region26: #{tpu_custom_call.1} parent=5 // pred_check_branch
      %168 = sbr.rel (%p166) target = $region28
    $region27: #{tpu_custom_call.1} parent=5 // pred_region
      // Predicated region
      $region29: #{tpu_custom_call.1} parent=27 // pred_check
        %p169 = pneg %p107
      $region30: #{tpu_custom_call.1} parent=27 // pred_check_branch
        %171 = sbr.rel (%p169) target = $region32
      $region31: #{tpu_custom_call.1} parent=27 // pred_region
        %s172 = smul.u32 2, %s18
        %p173 = scmp.lt.s32.totalorder %s17, 1
        %s174 = scalar_select %p173, %s17, 1
        %p175 = scmp.lt.s32.totalorder %s172, 1
        %s176 = scalar_select %p175, %s172, 1
        %s177 = smul.addr %s174, 10
        %s178 = sadd.s32 %s176, %s177
        %s179 = smul.addr %s178, 4
        %s180 = scalar_lea.vmem %s3, %s179
        %s181 = smul.u32 2, %s18
      $region32: #{tpu_custom_call.1} parent=27 // pred_fallthru
        _
    $region28: #{tpu_custom_call.1} parent=5 // pred_fallthru
      _
    %p182 = scmp.le.s32.totalorder 1, %s10
    %p183 = scmp.lt.s32.totalorder %s10, 3
    %p184 = pnand %p182, %p183
    %p185 = pneg %p184
    // Predicated region
    $region33: #{tpu_custom_call.1} parent=5 // pred_check
      _
    $region34: #{tpu_custom_call.1} parent=5 // pred_check_branch
      %187 = sbr.rel (%p184) target = $region36
    $region35: #{tpu_custom_call.1} parent=5 // pred_region
      %s188 = ssub.s32 %s10, 1
      %p189 = pneg %p43
      %p190 = pneg %p40
      %p191 = pneg %p64
      %p192 = pneg %p61
      %p193 = pneg %p85
      %p194 = pneg %p82
      %s195 = smul.u32 2, %s20
      %p196 = scmp.lt.s32.totalorder %s19, 1
      %s197 = scalar_select %p196, %s19, 1
      %p198 = scmp.lt.s32.totalorder %s195, 1
      %s199 = scalar_select %p198, %s195, 1
      %s200 = smul.addr %s197, 10
      %s201 = sadd.s32 %s199, %s200
      %s202 = smul.addr %s201, 4
      %s203 = scalar_lea.vmem %s3, %s202
      %p204 = pneg %p113
      %p205 = pneg %p110
      %p206 = pneg %p141
      %p207 = pneg %p138
      %s208 = smul.u32 2, %s20
      %p209 = scmp.lt.s32.totalorder %s19, 1
      %s210 = scalar_select %p209, %s19, 1
      %p211 = scmp.lt.s32.totalorder %s208, 1
      %s212 = scalar_select %p211, %s208, 1
      %s213 = smul.addr %s210, 4
      %s214 = sadd.s32 %s212, %s213
      %s215 = smul.addr %s214, 8
      %s216 = scalar_lea.vmem %s4, %s215
      %s217 = smul.u32 2, %s20
      %p218 = scmp.lt.s32.totalorder %s19, 1
      %s219 = scalar_select %p218, %s19, 1
      %p220 = scmp.lt.s32.totalorder %s217, 1
      %s221 = scalar_select %p220, %s217, 1
      %s222 = smul.addr %s219, 10
      %s223 = sadd.s32 %s221, %s222
      %s224 = smul.addr %s223, 4
      %s225 = scalar_lea.vmem %s3, %s224
      %s226 = smul.u32 2, %s20
      %s227 = smul.u32 2, %s20
      %p228 = scmp.lt.s32.totalorder %s19, 1
      %s229 = scalar_select %p228, %s19, 1
      %p230 = scmp.lt.s32.totalorder %s227, 1
      %s231 = scalar_select %p230, %s227, 1
      %s232 = smul.addr %s229, 4
      %s233 = sadd.s32 %s231, %s232
      %s234 = smul.addr %s233, 8
      %s235 = scalar_lea.vmem %s4, %s234
      %s236 = smul.u32 2, %s20
      %v238 = vld [vmem:[%s0] sm:$0xf]
      %v239 = vld [vmem:[%s0 + $0x4] sm:$0x3]
      %v240 = vld [vmem:[%s225] sm:$0xff]
      %v241 = vld [vmem:[%s225 + $0x8] sm:$0xff]
      %v242 = vld [vmem:[%s225 + $0x10] sm:$0xff]
      %v243 = vld [vmem:[%s225 + $0x18] sm:$0xff]
      %v244 = vld [vmem:[%s225 + $0x20] sm:$0x33]
      %v247 = vunpack.c.l.b16 %v238
      %v248 = vunpack.c.l.b16 %v239
      %v249 = vpack.c.b16 %v248, %v247
      %v255 = vunpack.c.l.b16 %v240
      %v256 = vunpack.c.h.b16 %v240
      %v257 = vunpack.c.l.b16 %v241
      %v258 = vunpack.c.h.b16 %v241
      %v259 = vunpack.c.l.b16 %v242
      %v260 = vunpack.c.h.b16 %v242
      %v261 = vunpack.c.l.b16 %v243
      %v262 = vunpack.c.h.b16 %v243
      %v263 = vunpack.c.l.b16 %v244
      %v264 = vunpack.c.h.b16 %v244
      %v265 = vpack.c.b16 %v257, %v255
      %v266 = vpack.c.b16 %v258, %v256
      %v267 = vpack.c.b16 %v261, %v259
      %v268 = vpack.c.b16 %v262, %v260
      %v269 = vpack.c.b16 %v263, %v263
      %v270 = vpack.c.b16 %v264, %v264
      %vm275 = vcmask 293888
      %v277 = vsel %vm275, %v249, 0
      %vm279 = vcmask 1041408
      %v281 = vsel %vm279, %v269, 0
      %v284 = vsel %vm279, %v270, 0
      %286 = vmatpush.bf16.msra.mxu0 0
      %287 = vmatpush.bf16.msra.mxu0 0
      %288 = vmatpush.bf16.msra.mxu0 0
      %289 = vmatpush.bf16.msra.mxu0 0
      %290 = vmatpush.bf16.msra.mxu0 0
      %291 = vmatpush.bf16.msra.mxu0 %v281
      %292 = vmatpush.bf16.msra.mxu0 %v267
      %293 = vmatpush.bf16.msra.mxu0 %v265
      %294 = vmatmul.bf16.gmra.mxu0 %v277
      %v295 = vpop.f32.mrf.mxu0
      %v296 = vadd.f32 0.0, %v295
      %v297 = vpop.f32.mrf.mxu0
      %v298 = vadd.f32 0.0, %v297
      %299 = vdwg.mxu0
      %300 = vmatpush.bf16.msra.mxu0 0
      %301 = vmatpush.bf16.msra.mxu0 0
      %302 = vmatpush.bf16.msra.mxu0 0
      %303 = vmatpush.bf16.msra.mxu0 0
      %304 = vmatpush.bf16.msra.mxu0 0
      %305 = vmatpush.bf16.msra.mxu0 %v284
      %306 = vmatpush.bf16.msra.mxu0 %v268
      %307 = vmatpush.bf16.msra.mxu0 %v266
      %308 = vmatmul.bf16.gmra.mxu0 %v277
      %v309 = vpop.f32.mrf.mxu0
      %v310 = vadd.f32 0.0, %v309
      %v311 = vpop.f32.mrf.mxu0
      %v312 = vadd.f32 0.0, %v311
      %313 = vdwg.mxu0
      %v314 = vld [vmem:[%s1] sm:$0xff]
      %v315 = vld [vmem:[%s1 + $0x8] sm:$0xf]
      %317 = vset.pattern.permute.xlu0 0
      %318 = vperm.xlu0 %317, %v314
      %v319 = vpop.permute.xlu0 %318
      %322 = vset.pattern.permute.xlu0 0
      %323 = vperm.xlu0 %322, %v315
      %v324 = vpop.permute.xlu0 %323
      %v326 = vmul.f32 %v296, %v319
      %v327 = vmul.f32 %v310, %v319
      %v328 = vmul.f32 %v298, %v324
      %v329 = vmul.f32 %v312, %v324
      %v330 = vld [vmem:[%s2] sm:$0xff]
      %v331 = vld [vmem:[%s2 + $0x8] sm:$0xf]
      %333 = vset.pattern.permute.xlu0 0
      %334 = vperm.xlu0 %333, %v330
      %v335 = vpop.permute.xlu0 %334
      %338 = vset.pattern.permute.xlu0 0
      %339 = vperm.xlu0 %338, %v331
      %v340 = vpop.permute.xlu0 %339
      %v342 = vadd.f32 %v326, %v335
      %v343 = vadd.f32 %v327, %v335
      %v344 = vadd.f32 %v328, %v340
      %v345 = vadd.f32 %v329, %v340
      %v346 = vmax.f32 %v342, 0.0
      %v347 = vmax.f32 %v343, 0.0
      %v348 = vmax.f32 %v344, 0.0
      %v349 = vmax.f32 %v345, 0.0
      %350 = vst [vmem:[%s235] sm:$0xff] %v346
      %351 = vst [vmem:[%s235 + $0x8] sm:$0xff] %v347
      %352 = vst [vmem:[%s235 + $0x10] sm:$0xf] %v348
      %353 = vst [vmem:[%s235 + $0x18] sm:$0xf] %v349
      %s354 = smul.u32 2, %s20
      %p355 = scmp.lt.s32.totalorder %s19, 1
      %s356 = scalar_select %p355, %s19, 1
      %p357 = scmp.lt.s32.totalorder %s354, 1
      %s358 = scalar_select %p357, %s354, 1
      %s359 = smul.addr %s356, 4
      %s360 = sadd.s32 %s358, %s359
      %s361 = smul.addr %s360, 8
      %s362 = scalar_lea.vmem %s4, %s361
      // Predicated region
      $region37: #{tpu_custom_call.1} parent=35 // pred_check
        %p363 = pneg %p138
      $region38: #{tpu_custom_call.1} parent=35 // pred_check_branch
        %365 = sbr.rel (%p363) target = $region40
      $region39: #{tpu_custom_call.1} parent=35 // pred_region
        %s366 = smul.u32 2, %s20
      $region40: #{tpu_custom_call.1} parent=35 // pred_fallthru
        _
    $region36: #{tpu_custom_call.1} parent=5 // pred_fallthru
      _
    %p367 = scmp.le.s32.totalorder 2, %s10
    // Predicated region
    $region41: #{tpu_custom_call.1} parent=5 // pred_check
      %p368 = pneg %p367
    $region42: #{tpu_custom_call.1} parent=5 // pred_check_branch
      %370 = sbr.rel (%p368) target = $region44
    $region43: #{tpu_custom_call.1} parent=5 // pred_region
      %s371 = ssub.s32 %s10, 2
      // Predicated region
      $region45: #{tpu_custom_call.1} parent=43 // pred_check
        %p372 = pneg %p144
      $region46: #{tpu_custom_call.1} parent=43 // pred_check_branch
        %374 = sbr.rel (%p372) target = $region48
      $region47: #{tpu_custom_call.1} parent=43 // pred_region
        %s375 = smul.u32 2, %s22
        %p376 = scmp.lt.s32.totalorder %s21, 1
        %s377 = scalar_select %p376, %s21, 1
        %p378 = scmp.lt.s32.totalorder %s375, 1
        %s379 = scalar_select %p378, %s375, 1
        %s380 = smul.addr %s377, 4
        %s381 = sadd.s32 %s379, %s380
        %s382 = smul.addr %s381, 8
        %s383 = scalar_lea.vmem %s4, %s382
      $region48: #{tpu_custom_call.1} parent=43 // pred_fallthru
        _
    $region44: #{tpu_custom_call.1} parent=5 // pred_fallthru
      _
  $region6: #{tpu_custom_call.1} parent=0 // loop_footer
    %s14 = sadd.s32 1, %s10
  $region7: #{tpu_custom_call.1} parent=0 // loop_footer_branch
    %9 = sbr.rel target = $region3
  $region8: #{tpu_custom_call.1} parent=0 // loop_exit
    _

</llo_original>
